<compile_context>
chip_gen: v7x
topology: tpu7x:2x2x1
jax: 0.10.0
libtpu: 0.0.40
codegen_flags: <defaults>
</compile_context>

<pallas_src>
import functools

import jax
import jax.numpy as jnp
from jax import lax
from jax.experimental import pallas as pl
from jax.experimental.pallas import tpu as pltpu

EPS = 1e-8      # Encoder.EPS
LN_EPS = 1e-5   # nn.LayerNorm default eps


def _row_tile(m):
    """Largest of {512, 256, 128} dividing m, else m itself (single tile)."""
    for t in (512, 256, 128):
        if m % t == 0:
            return t
    return m


def _time_tile(k):
    """Time-chunk for the recurrent kernel (keeps VMEM bounded, pipelines DMA)."""
    for t in (64, 32, 16, 8):
        if k % t == 0 and k // t >= 2:
            return t
    return k


# ----------------------------------------------------------------------------
# Kernel 1: Encoder (L2 norm -> fused gated conv1d(kernel=1)) fused with the
# separator's LayerNorm.  Grid over row tiles of the flattened [B*K, L] input.
# ----------------------------------------------------------------------------
def _encoder_kernel(mix_ref, uv_ref, g_ref, beta_ref, w_ref, ln_ref, nc_ref, *, N):
    x = mix_ref[...]                                              # [TM, L]
    norm = jnp.sqrt(jnp.sum(x * x, axis=-1, keepdims=True))       # [TM, 1]
    normed = x / (norm + EPS)
    proj = jnp.dot(normed, uv_ref[...],
                   preferred_element_type=jnp.float32)            # [TM, 2N]
    conv = jnp.maximum(proj[:, :N], 0.0)
    gate = jax.nn.sigmoid(proj[:, N:])
    w = conv * gate                                               # [TM, N]
    w_ref[...] = w
    nc_ref[...] = norm
    # Separator.layer_norm (over last dim N), fused here.
    mu = jnp.mean(w, axis=-1, keepdims=True)
    var = jnp.mean((w - mu) ** 2, axis=-1, keepdims=True)
    ln_ref[...] = (w - mu) * lax.rsqrt(var + LN_EPS) * g_ref[...] + beta_ref[...]


def encoder(mix2d, uv, ln_g, ln_b):
    M, L = mix2d.shape
    N = uv.shape[1] // 2
    TM = _row_tile(M)
    return pl.pallas_call(
        functools.partial(_encoder_kernel, N=N),
        out_shape=(
            jax.ShapeDtypeStruct((M, N), jnp.float32),   # mixture_w
            jax.ShapeDtypeStruct((M, N), jnp.float32),   # layer-normed
            jax.ShapeDtypeStruct((M, 1), jnp.float32),   # norm_coef
        ),
        grid_spec=pltpu.PrefetchScalarGridSpec(
            num_scalar_prefetch=0,
            grid=(M // TM,),
            in_specs=[
                pl.BlockSpec((TM, L), lambda i: (i, 0)),
                pl.BlockSpec((L, 2 * N), lambda i: (0, 0)),
                pl.BlockSpec((1, N), lambda i: (0, 0)),
                pl.BlockSpec((1, N), lambda i: (0, 0)),
            ],
            out_specs=(
                pl.BlockSpec((TM, N), lambda i: (i, 0)),
                pl.BlockSpec((TM, N), lambda i: (i, 0)),
                pl.BlockSpec((TM, 1), lambda i: (i, 0)),
            ),
        ),
        compiler_params=pltpu.CompilerParams(dimension_semantics=("parallel",)),
    )(mix2d, uv, ln_g, ln_b)


# ----------------------------------------------------------------------------
# Kernel 2a: dense matmul + bias (hoisted LSTM input projection, per layer).
# ----------------------------------------------------------------------------
def _matmul_bias_kernel(x_ref, w_ref, b_ref, o_ref):
    o_ref[...] = (jnp.dot(x_ref[...], w_ref[...],
                          preferred_element_type=jnp.float32) + b_ref[...])


def matmul_bias(x, w, b):
    M, D = x.shape
    F = w.shape[1]
    TM = _row_tile(M)
    return pl.pallas_call(
        _matmul_bias_kernel,
        out_shape=jax.ShapeDtypeStruct((M, F), jnp.float32),
        grid_spec=pltpu.PrefetchScalarGridSpec(
            num_scalar_prefetch=0,
            grid=(M // TM,),
            in_specs=[
                pl.BlockSpec((TM, D), lambda i: (i, 0)),
                pl.BlockSpec((D, F), lambda i: (0, 0)),
                pl.BlockSpec((1, F), lambda i: (0, 0)),
            ],
            out_specs=pl.BlockSpec((TM, F), lambda i: (i, 0)),
        ),
        compiler_params=pltpu.CompilerParams(dimension_semantics=("parallel",)),
    )(x, w, b)


# ----------------------------------------------------------------------------
# Kernel 2b: LSTM recurrence only.  Time-major input zx = x @ W_ih + b of shape
# [K, B, 4H], chunked over time: each grid step streams a [TK, B, 4H] slab of
# zx into VMEM (auto double-buffered) and a [TK, B, H] slab of hidden states
# out, while (h, c) persist in VMEM scratch across grid steps.
# Gate order matches PyTorch: i, f, g, o.
# ----------------------------------------------------------------------------
def _lstm_recurrent_kernel(zx_ref, whh_ref, out_ref, h_sc, c_sc, *, hidden, unroll):
    TK = zx_ref.shape[0]
    H = hidden

    @pl.when(pl.program_id(0) == 0)
    def _():
        h_sc[...] = jnp.zeros_like(h_sc)
        c_sc[...] = jnp.zeros_like(c_sc)

    def step(t, carry):
        h, c = carry
        z = zx_ref[t] + jnp.dot(h, whh_ref[...],
                                preferred_element_type=jnp.float32)   # [B, 4H]
        i = jax.nn.sigmoid(z[:, 0 * H:1 * H])
        f = jax.nn.sigmoid(z[:, 1 * H:2 * H])
        g = jnp.tanh(z[:, 2 * H:3 * H])
        o = jax.nn.sigmoid(z[:, 3 * H:4 * H])
        c = f * c + i * g
        h = o * jnp.tanh(c)
        out_ref[t] = h
        return (h, c)

    h_fin, c_fin = lax.fori_loop(0, TK, step, (h_sc[...], c_sc[...]),
                                 unroll=unroll)
    h_sc[...] = h_fin
    c_sc[...] = c_fin


def lstm_recurrent(zx, whh):
    K, B, F = zx.shape
    H = whh.shape[0]
    TK = _time_tile(K)
    unroll = TK if TK <= 8 else 8
    return pl.pallas_call(
        functools.partial(_lstm_recurrent_kernel, hidden=H, unroll=unroll),
        out_shape=jax.ShapeDtypeStruct((K, B, H), jnp.float32),
        grid_spec=pltpu.PrefetchScalarGridSpec(
            num_scalar_prefetch=0,
            grid=(K // TK,),
            in_specs=[
                pl.BlockSpec((TK, B, F), lambda i: (i, 0, 0)),
                pl.BlockSpec((H, F), lambda i: (0, 0)),
            ],
            out_specs=pl.BlockSpec((TK, B, H), lambda i: (i, 0, 0)),
            scratch_shapes=[
                pltpu.VMEM((B, H), jnp.float32),   # h carry
                pltpu.VMEM((B, H), jnp.float32),   # c carry
            ],
        ),
        compiler_params=pltpu.CompilerParams(dimension_semantics=("arbitrary",)),
    )(zx, whh)


# ----------------------------------------------------------------------------
# Kernel 3: separator fc + softmax over speakers + decoder (masking, stacked
# basis matmul, renormalization) fused.  Grid over row tiles of [B*K, H].
# ----------------------------------------------------------------------------
def _head_kernel(h_ref, fcw_ref, fcb_ref, w_ref, nc_ref, basis_ref, out_ref,
                 *, nspk, N):
    TM = h_ref.shape[0]
    score = (jnp.dot(h_ref[...], fcw_ref[...],
                     preferred_element_type=jnp.float32)
             + fcb_ref[...])                                       # [TM, nspk*N]
    parts = [score[:, s * N:(s + 1) * N] for s in range(nspk)]
    m = parts[0]
    for p in parts[1:]:
        m = jnp.maximum(m, p)
    exps = [jnp.exp(p - m) for p in parts]
    den = exps[0]
    for e in exps[1:]:
        den = den + e
    inv_den = 1.0 / den

    mw = w_ref[...]                                                # [TM, N]
    nc = nc_ref[...]                                               # [TM, 1]
    # Stack all speakers into one [nspk*TM, N] operand -> single MXU matmul.
    src = jnp.concatenate([mw * (e * inv_den) for e in exps], axis=0)
    est = jnp.dot(src, basis_ref[...],
                  preferred_element_type=jnp.float32)              # [nspk*TM, L]
    for s in range(nspk):
        out_ref[s, :, :] = est[s * TM:(s + 1) * TM, :] * nc


def head(h2d, fc_w, fc_b, w2d, nc2d, basis, nspk):
    M, H = h2d.shape
    N, L = basis.shape
    TM = _row_tile(M)
    return pl.pallas_call(
        functools.partial(_head_kernel, nspk=nspk, N=N),
        out_shape=jax.ShapeDtypeStruct((nspk, M, L), jnp.float32),
        grid_spec=pltpu.PrefetchScalarGridSpec(
            num_scalar_prefetch=0,
            grid=(M // TM,),
            in_specs=[
                pl.BlockSpec((TM, H), lambda i: (i, 0)),
                pl.BlockSpec((H, nspk * N), lambda i: (0, 0)),
                pl.BlockSpec((1, nspk * N), lambda i: (0, 0)),
                pl.BlockSpec((TM, N), lambda i: (i, 0)),
                pl.BlockSpec((TM, 1), lambda i: (i, 0)),
                pl.BlockSpec((N, L), lambda i: (0, 0)),
            ],
            out_specs=pl.BlockSpec((nspk, TM, L), lambda i: (0, i, 0)),
        ),
        compiler_params=pltpu.CompilerParams(dimension_semantics=("parallel",)),
    )(h2d, fc_w, fc_b, w2d, nc2d, basis)


# ----------------------------------------------------------------------------
# Parameter init (deterministic; shapes follow the PyTorch module __init__).
# Conv1d(kernel=1)/Linear weights are stored pre-transposed to [in, out].
# ----------------------------------------------------------------------------
def init_params(key, L, N, H, num_layers, nspk):
    keys = iter(jax.random.split(key, 16 + 4 * num_layers))

    def unif(k, shape, fan_in):
        bound = 1.0 / jnp.sqrt(jnp.float32(fan_in))
        return jax.random.uniform(k, shape, jnp.float32, -bound, bound)

    p = {}
    p["enc_u"] = unif(next(keys), (L, N), L)      # conv1d_U.weight^T (kernel=1)
    p["enc_v"] = unif(next(keys), (L, N), L)      # conv1d_V.weight^T
    p["enc_uv"] = jnp.concatenate([p["enc_u"], p["enc_v"]], axis=1)   # fused [L, 2N]
    p["ln_g"] = jnp.ones((1, N), jnp.float32)
    p["ln_b"] = jnp.zeros((1, N), jnp.float32)
    p["lstm_wih"], p["lstm_whh"], p["lstm_b"] = [], [], []
    for layer in range(num_layers):
        in_dim = N if layer == 0 else H
        p["lstm_wih"].append(unif(next(keys), (in_dim, 4 * H), H))
        p["lstm_whh"].append(unif(next(keys), (H, 4 * H), H))
        b_ih = unif(next(keys), (1, 4 * H), H)
        b_hh = unif(next(keys), (1, 4 * H), H)
        p["lstm_b"].append(b_ih + b_hh)
    p["fc_w"] = unif(next(keys), (H, nspk * N), H)
    p["fc_b"] = unif(next(keys), (1, nspk * N), H)
    p["basis"] = unif(next(keys), (N, L), N)      # basis_signals.weight^T
    return p


# ----------------------------------------------------------------------------
# Full TasNet forward.  Layout plumbing (batch-major <-> time-major) is done
# here in plain JAX so the kernels always see dense row-tiled operands.
# ----------------------------------------------------------------------------
# TODO(synk): bidirectional=True is not implemented (module default is False);
#             it would need a second reversed-time recurrent pass + concat.
def tasnet_forward(params, mixture, *, num_layers, nspk):
    B, K, L = mixture.shape
    N = params["enc_uv"].shape[1] // 2
    H = params["lstm_whh"][0].shape[0]
    M = B * K

    mix2d = mixture.reshape(M, L)
    w2d, ln2d, nc2d = encoder(mix2d, params["enc_uv"],
                              params["ln_g"], params["ln_b"])

    # Time-major layout [K, B, feat] for the recurrent kernels.
    x_tm = jnp.transpose(ln2d.reshape(B, K, N), (1, 0, 2))
    for layer in range(num_layers):
        D = x_tm.shape[-1]
        zx = matmul_bias(x_tm.reshape(K * B, D),
                         params["lstm_wih"][layer], params["lstm_b"][layer])
        x_tm = lstm_recurrent(zx.reshape(K, B, 4 * H), params["lstm_whh"][layer])

    h2d = jnp.transpose(x_tm, (1, 0, 2)).reshape(M, H)
    out = head(h2d, params["fc_w"], params["fc_b"], w2d, nc2d,
               params["basis"], nspk)                              # [nspk, B*K, L]
    return jnp.transpose(out.reshape(nspk, B, K, L), (1, 0, 2, 3))  # [B, nspk, K, L]


# ----------------------------------------------------------------------------
# Pure-JAX reference (same math, no Pallas) for a sanity check.
# ----------------------------------------------------------------------------
def tasnet_ref(params, mixture, num_layers, nspk, H):
    norm = jnp.sqrt(jnp.sum(mixture ** 2, axis=-1, keepdims=True))
    normed = mixture / (norm + EPS)
    conv = jax.nn.relu(normed @ params["enc_u"])
    gate = jax.nn.sigmoid(normed @ params["enc_v"])
    w = conv * gate
    mu = jnp.mean(w, -1, keepdims=True)
    var = jnp.mean((w - mu) ** 2, -1, keepdims=True)
    x = (w - mu) / jnp.sqrt(var + LN_EPS) * params["ln_g"] + params["ln_b"]
    B, K, N = w.shape
    for layer in range(num_layers):
        wih, whh, b = (params["lstm_wih"][layer], params["lstm_whh"][layer],
                       params["lstm_b"][layer])

        def step(carry, x_t):
            h, c = carry
            z = x_t @ wih + h @ whh + b
            i = jax.nn.sigmoid(z[:, :H])
            f = jax.nn.sigmoid(z[:, H:2 * H])
            g = jnp.tanh(z[:, 2 * H:3 * H])
            o = jax.nn.sigmoid(z[:, 3 * H:4 * H])
            c = f * c + i * g
            h = o * jnp.tanh(c)
            return (h, c), h

        h0 = jnp.zeros((B, H), jnp.float32)
        c0 = jnp.zeros((B, H), jnp.float32)
        _, hs = lax.scan(step, (h0, c0), jnp.swapaxes(x, 0, 1))
        x = jnp.swapaxes(hs, 0, 1)
    score = x @ params["fc_w"] + params["fc_b"]
    score = score.reshape(B, K, nspk, N)
    mask = jax.nn.softmax(score, axis=2)
    src = w[:, :, None, :] * mask
    est = src @ params["basis"]                        # [B, K, nspk, L]
    est = est * norm[:, :, None, :]
    return jnp.transpose(est, (0, 2, 1, 3))            # [B, nspk, K, L]


if __name__ == "__main__":
    # Small shapes; K=32 exercises the chunked (multi-grid-step) LSTM recurrence.
    B, K, L, N, H = 2, 32, 16, 32, 32
    num_layers, nspk = 2, 2

    key = jax.random.PRNGKey(0)
    pkey, xkey = jax.random.split(key)
    params = init_params(pkey, L, N, H, num_layers, nspk)
    mixture = jax.random.normal(xkey, (B, K, L), jnp.float32)

    out = tasnet_forward(params, mixture, num_layers=num_layers, nspk=nspk)
    out = jax.block_until_ready(out)

    ref = tasnet_ref(params, mixture, num_layers, nspk, H)
    assert out.shape == (B, nspk, K, L), out.shape
    err = float(jnp.max(jnp.abs(out - ref)))
    assert err < 1e-2, f"max abs err {err}"
    print("KERNEL_OK")
</pallas_src>

<mosaic_0001>
module attributes {stable_mosaic.version = 11 : i64} {
  func.func @_encoder_kernel(%arg0: i32, %arg1: memref<64x16xf32, #tpu.memory_space<vmem>>, %arg2: memref<16x64xf32, #tpu.memory_space<vmem>>, %arg3: memref<1x32xf32, #tpu.memory_space<vmem>>, %arg4: memref<1x32xf32, #tpu.memory_space<vmem>>, %arg5: memref<64x32xf32, #tpu.memory_space<vmem>>, %arg6: memref<64x32xf32, #tpu.memory_space<vmem>>, %arg7: memref<64x1xf32, #tpu.memory_space<vmem>>) attributes {dimension_semantics = [#tpu.dimension_semantics<parallel>], iteration_bounds = array<i64: 1>, scalar_prefetch = 0 : i64, scratch_operands = 0 : i64, tpu.core_type = #tpu.core_type<tc>, window_params = [{transform_indices = @transform_0, window_bounds = array<i64: 64, 16>}, {pipeline_mode = #tpu.pipeline_mode<synchronous>, transform_indices = @transform_1, window_bounds = array<i64: 16, 64>}, {pipeline_mode = #tpu.pipeline_mode<synchronous>, transform_indices = @transform_2, window_bounds = array<i64: 1, 32>}, {pipeline_mode = #tpu.pipeline_mode<synchronous>, transform_indices = @transform_3, window_bounds = array<i64: 1, 32>}, {transform_indices = @transform_4, window_bounds = array<i64: 64, 32>}, {transform_indices = @transform_5, window_bounds = array<i64: 64, 32>}, {transform_indices = @transform_6, window_bounds = array<i64: 64, 1>}]} {
    %c0 = arith.constant 0 : index
    %c0_0 = arith.constant 0 : index
    %0 = vector.load %arg1[%c0, %c0_0] : memref<64x16xf32, #tpu.memory_space<vmem>>, vector<64x16xf32>
    %1 = arith.mulf %0, %0 : vector<64x16xf32>
    %cst = arith.constant dense<0.000000e+00> : vector<64xf32>
    %2 = vector.multi_reduction <add>, %1, %cst [1] : vector<64x16xf32> to vector<64xf32>
    %3 = vector.shape_cast %2 : vector<64xf32> to vector<64x1xf32>
    %4 = math.sqrt %3 : vector<64x1xf32>
    %cst_1 = arith.constant 9.99999993E-9 : f32
    %5 = vector.broadcast %cst_1 : f32 to vector<64x1xf32>
    %6 = arith.addf %4, %5 : vector<64x1xf32>
    %7 = vector.broadcast %6 : vector<64x1xf32> to vector<64x16xf32>
    %8 = arith.divf %0, %7 : vector<64x16xf32>
    %c0_2 = arith.constant 0 : index
    %c0_3 = arith.constant 0 : index
    %9 = vector.load %arg2[%c0_2, %c0_3] : memref<16x64xf32, #tpu.memory_space<vmem>>, vector<16x64xf32>
    %cst_4 = arith.constant dense<0.000000e+00> : vector<64x64xf32>
    %10 = tpu.matmul %8, %9, %cst_4 {dimension_numbers = #tpu.dot_dimension_numbers<[1], [0], [0], [1], [0, 0, 1, 1], [], []>} : vector<64x16xf32>, vector<16x64xf32>, vector<64x64xf32> -> vector<64x64xf32>
    %11 = vector.extract_strided_slice %10 {offsets = [0, 0], sizes = [64, 32], strides = [1, 1]} : vector<64x64xf32> to vector<64x32xf32>
    %cst_5 = arith.constant 0.000000e+00 : f32
    %12 = vector.broadcast %cst_5 : f32 to vector<64x32xf32>
    %13 = arith.maximumf %11, %12 : vector<64x32xf32>
    %14 = vector.extract_strided_slice %10 {offsets = [0, 32], sizes = [64, 32], strides = [1, 1]} : vector<64x64xf32> to vector<64x32xf32>
    %15 = arith.negf %14 : vector<64x32xf32>
    %16 = math.exp %15 : vector<64x32xf32>
    %cst_6 = arith.constant 1.000000e+00 : f32
    %17 = vector.broadcast %cst_6 : f32 to vector<64x32xf32>
    %18 = arith.addf %17, %16 : vector<64x32xf32>
    %19 = arith.divf %17, %18 : vector<64x32xf32>
    %20 = arith.mulf %13, %19 : vector<64x32xf32>
    %c0_7 = arith.constant 0 : index
    %c0_8 = arith.constant 0 : index
    %21 = vector.load %arg5[%c0_7, %c0_8] : memref<64x32xf32, #tpu.memory_space<vmem>>, vector<64x32xf32>
    tpu.vector_store %arg5[%c0_7, %c0_8], %20 {strides = array<i32>} : memref<64x32xf32, #tpu.memory_space<vmem>>, vector<64x32xf32>,
    %c0_9 = arith.constant 0 : index
    %c0_10 = arith.constant 0 : index
    %22 = vector.load %arg7[%c0_9, %c0_10] : memref<64x1xf32, #tpu.memory_space<vmem>>, vector<64x1xf32>
    tpu.vector_store %arg7[%c0_9, %c0_10], %4 {strides = array<i32>} : memref<64x1xf32, #tpu.memory_space<vmem>>, vector<64x1xf32>,
    %cst_11 = arith.constant dense<0.000000e+00> : vector<64xf32>
    %23 = vector.multi_reduction <add>, %20, %cst_11 [1] : vector<64x32xf32> to vector<64xf32>
    %24 = vector.shape_cast %23 : vector<64xf32> to vector<64x1xf32>
    %cst_12 = arith.constant 3.200000e+01 : f32
    %25 = vector.broadcast %cst_12 : f32 to vector<64x1xf32>
    %26 = arith.divf %24, %25 : vector<64x1xf32>
    %27 = vector.broadcast %26 : vector<64x1xf32> to vector<64x32xf32>
    %28 = arith.subf %20, %27 : vector<64x32xf32>
    %29 = arith.mulf %28, %28 : vector<64x32xf32>
    %cst_13 = arith.constant dense<0.000000e+00> : vector<64xf32>
    %30 = vector.multi_reduction <add>, %29, %cst_13 [1] : vector<64x32xf32> to vector<64xf32>
    %31 = vector.shape_cast %30 : vector<64xf32> to vector<64x1xf32>
    %cst_14 = arith.constant 3.200000e+01 : f32
    %32 = vector.broadcast %cst_14 : f32 to vector<64x1xf32>
    %33 = arith.divf %31, %32 : vector<64x1xf32>
    %34 = vector.broadcast %26 : vector<64x1xf32> to vector<64x32xf32>
    %35 = arith.subf %20, %34 : vector<64x32xf32>
    %cst_15 = arith.constant 9.99999974E-6 : f32
    %36 = vector.broadcast %cst_15 : f32 to vector<64x1xf32>
    %37 = arith.addf %33, %36 : vector<64x1xf32>
    %38 = math.rsqrt %37 : vector<64x1xf32>
    %39 = vector.broadcast %38 : vector<64x1xf32> to vector<64x32xf32>
    %40 = arith.mulf %35, %39 : vector<64x32xf32>
    %c0_16 = arith.constant 0 : index
    %c0_17 = arith.constant 0 : index
    %41 = vector.load %arg3[%c0_16, %c0_17] : memref<1x32xf32, #tpu.memory_space<vmem>>, vector<1x32xf32>
    %42 = vector.broadcast %41 : vector<1x32xf32> to vector<64x32xf32>
    %43 = arith.mulf %40, %42 : vector<64x32xf32>
    %c0_18 = arith.constant 0 : index
    %c0_19 = arith.constant 0 : index
    %44 = vector.load %arg4[%c0_18, %c0_19] : memref<1x32xf32, #tpu.memory_space<vmem>>, vector<1x32xf32>
    %45 = vector.broadcast %44 : vector<1x32xf32> to vector<64x32xf32>
    %46 = arith.addf %43, %45 : vector<64x32xf32>
    %c0_20 = arith.constant 0 : index
    %c0_21 = arith.constant 0 : index
    %47 = vector.load %arg6[%c0_20, %c0_21] : memref<64x32xf32, #tpu.memory_space<vmem>>, vector<64x32xf32>
    tpu.vector_store %arg6[%c0_20, %c0_21], %46 {strides = array<i32>} : memref<64x32xf32, #tpu.memory_space<vmem>>, vector<64x32xf32>,
    return
  }
  func.func @transform_0(%arg0: i32) -> (i32, i32) {
    %c0_i32 = arith.constant 0 : i32
    %c0_i32_0 = arith.constant 0 : i32
    return %arg0, %c0_i32 : i32, i32
  }
  func.func @transform_1(%arg0: i32) -> (i32, i32) {
    %c0_i32 = arith.constant 0 : i32
    %c0_i32_0 = arith.constant 0 : i32
    %c0_i32_1 = arith.constant 0 : i32
    return %c0_i32, %c0_i32_0 : i32, i32
  }
  func.func @transform_2(%arg0: i32) -> (i32, i32) {
    %c0_i32 = arith.constant 0 : i32
    %c0_i32_0 = arith.constant 0 : i32
    %c0_i32_1 = arith.constant 0 : i32
    return %c0_i32, %c0_i32_0 : i32, i32
  }
  func.func @transform_3(%arg0: i32) -> (i32, i32) {
    %c0_i32 = arith.constant 0 : i32
    %c0_i32_0 = arith.constant 0 : i32
    %c0_i32_1 = arith.constant 0 : i32
    return %c0_i32, %c0_i32_0 : i32, i32
  }
  func.func @transform_4(%arg0: i32) -> (i32, i32) {
    %c0_i32 = arith.constant 0 : i32
    %c0_i32_0 = arith.constant 0 : i32
    return %arg0, %c0_i32 : i32, i32
  }
  func.func @transform_5(%arg0: i32) -> (i32, i32) {
    %c0_i32 = arith.constant 0 : i32
    %c0_i32_0 = arith.constant 0 : i32
    return %arg0, %c0_i32 : i32, i32
  }
  func.func @transform_6(%arg0: i32) -> (i32, i32) {
    %c0_i32 = arith.constant 0 : i32
    %c0_i32_0 = arith.constant 0 : i32
    return %arg0, %c0_i32 : i32, i32
  }
}

</mosaic_0001>

<llo_original>
// kernel: tpu_custom_call.1
$region0: #{tpu_custom_call.1}
  #allocation0 [shape = 'u32[]', space=smem, size = 0x4, offset = 0x4, fixed_abs, tag = 'smem constant byte address 0x4 - core index']
  #allocation1 [shape = 'u32[144,128]{1,0:T(1,128)}', space=vmem, size = 0x12000, scoped, tag = 'internal scratch']
  %s0 = inlined_call_operand.vmem [shape: f32[64,16], index: 0, kind: input, shape index: {}]
  %s1 = inlined_call_operand.vmem [shape: f32[16,64], index: 1, kind: input, shape index: {}]
  %s2 = inlined_call_operand.vmem [shape: f32[1,32], index: 2, kind: input, shape index: {}]
  %s3 = inlined_call_operand.vmem [shape: f32[1,32], index: 3, kind: input, shape index: {}]
  %s4 = inlined_call_operand.vmem [shape: f32[64,32], index: 4, kind: output, shape index: {0}]
  %s5 = inlined_call_operand.vmem [shape: f32[64,32], index: 5, kind: output, shape index: {1}]
  %s6 = inlined_call_operand.vmem [shape: f32[64,1], index: 6, kind: output, shape index: {2}]
  %7 = xla_tuple %s4, %s5, %s6
  %s8 = sld [smem:[#allocation0]]
  $region42: #{tpu_custom_call.1} parent=0
    _
  %s10 = ssub.s32 1, %s8
  %s11 = scalar_select 0, %s10, %s8
  // Predicated region
  $region2: #{tpu_custom_call.1} parent=0 // pred_check
    _
  $region3: #{tpu_custom_call.1} parent=0 // pred_check_branch
    %13 = sbr.rel (0) target = $region5
  $region4: #{tpu_custom_call.1} parent=0 // pred_region
    _
  $region5: #{tpu_custom_call.1} parent=0 // pred_fallthru
    _
  // Predicated region
  $region6: #{tpu_custom_call.1} parent=0 // pred_check
    _
  $region7: #{tpu_custom_call.1} parent=0 // pred_check_branch
    %15 = sbr.rel (0) target = $region9
  $region8: #{tpu_custom_call.1} parent=0 // pred_region
    _
  $region9: #{tpu_custom_call.1} parent=0 // pred_fallthru
    _
  // Predicated region
  $region10: #{tpu_custom_call.1} parent=0 // pred_check
    _
  $region11: #{tpu_custom_call.1} parent=0 // pred_check_branch
    %17 = sbr.rel (0) target = $region13
  $region12: #{tpu_custom_call.1} parent=0 // pred_region
    _
  $region13: #{tpu_custom_call.1} parent=0 // pred_fallthru
    _
  // Predicated region
  $region14: #{tpu_custom_call.1} parent=0 // pred_check
    _
  $region15: #{tpu_custom_call.1} parent=0 // pred_check_branch
    %19 = sbr.rel (0) target = $region17
  $region16: #{tpu_custom_call.1} parent=0 // pred_region
    _
  $region17: #{tpu_custom_call.1} parent=0 // pred_fallthru
    _
  %v20 = vld [vmem:[%s0] sm:$0xff]
  %v21 = vld [vmem:[%s0 + $0x8] sm:$0xff]
  %v22 = vld [vmem:[%s0 + $0x10] sm:$0xff]
  %v23 = vld [vmem:[%s0 + $0x18] sm:$0xff]
  %v24 = vld [vmem:[%s0 + $0x20] sm:$0xff]
  %v25 = vld [vmem:[%s0 + $0x28] sm:$0xff]
  %v26 = vld [vmem:[%s0 + $0x30] sm:$0xff]
  %v27 = vld [vmem:[%s0 + $0x38] sm:$0xff]
  %v28 = vmul.f32 %v20, %v20
  %v29 = vmul.f32 %v21, %v21
  %v30 = vmul.f32 %v22, %v22
  %v31 = vmul.f32 %v23, %v23
  %v32 = vmul.f32 %v24, %v24
  %v33 = vmul.f32 %v25, %v25
  %v34 = vmul.f32 %v26, %v26
  %v35 = vmul.f32 %v27, %v27
  %vm36 = vcmask 130048
  %v37 = vsel %vm36, %v28, 0.0
  %38 = vadd.xlane.f32.xlu0 %v37
  %v39 = vpop.xlane.xlu0 %38
  %v40 = vsel %vm36, %v29, 0.0
  %41 = vadd.xlane.f32.xlu0 %v40
  %v42 = vpop.xlane.xlu0 %41
  %v43 = vsel %vm36, %v30, 0.0
  %44 = vadd.xlane.f32.xlu0 %v43
  %v45 = vpop.xlane.xlu0 %44
  %v46 = vsel %vm36, %v31, 0.0
  %47 = vadd.xlane.f32.xlu0 %v46
  %v48 = vpop.xlane.xlu0 %47
  %v49 = vsel %vm36, %v32, 0.0
  %50 = vadd.xlane.f32.xlu0 %v49
  %v51 = vpop.xlane.xlu0 %50
  %v52 = vsel %vm36, %v33, 0.0
  %53 = vadd.xlane.f32.xlu0 %v52
  %v54 = vpop.xlane.xlu0 %53
  %v55 = vsel %vm36, %v34, 0.0
  %56 = vadd.xlane.f32.xlu0 %v55
  %v57 = vpop.xlane.xlu0 %56
  %v58 = vsel %vm36, %v35, 0.0
  %59 = vadd.xlane.f32.xlu0 %v58
  %v60 = vpop.xlane.xlu0 %59
  %v61 = vrsqrt.pop %v39
  %v62 = vmul.f32 %v39, %v61
  %vm63 = vcmp.eq.f32.partialorder %v39, inf
  %v64 = vsel %vm63, %v39, %v62
  %vm65 = vcmp.eq.f32.partialorder %v39, 0.0
  %v66 = vand.u32 %v39, 2147483648
  %v67 = vsel %vm65, %v66, %v64
  %v68 = vrsqrt.pop %v42
  %v69 = vmul.f32 %v42, %v68
  %vm70 = vcmp.eq.f32.partialorder %v42, inf
  %v71 = vsel %vm70, %v42, %v69
  %vm72 = vcmp.eq.f32.partialorder %v42, 0.0
  %v73 = vand.u32 %v42, 2147483648
  %v74 = vsel %vm72, %v73, %v71
  %v75 = vrsqrt.pop %v45
  %v76 = vmul.f32 %v45, %v75
  %vm77 = vcmp.eq.f32.partialorder %v45, inf
  %v78 = vsel %vm77, %v45, %v76
  %vm79 = vcmp.eq.f32.partialorder %v45, 0.0
  %v80 = vand.u32 %v45, 2147483648
  %v81 = vsel %vm79, %v80, %v78
  %v82 = vrsqrt.pop %v48
  %v83 = vmul.f32 %v48, %v82
  %vm84 = vcmp.eq.f32.partialorder %v48, inf
  %v85 = vsel %vm84, %v48, %v83
  %vm86 = vcmp.eq.f32.partialorder %v48, 0.0
  %v87 = vand.u32 %v48, 2147483648
  %v88 = vsel %vm86, %v87, %v85
  %v89 = vrsqrt.pop %v51
  %v90 = vmul.f32 %v51, %v89
  %vm91 = vcmp.eq.f32.partialorder %v51, inf
  %v92 = vsel %vm91, %v51, %v90
  %vm93 = vcmp.eq.f32.partialorder %v51, 0.0
  %v94 = vand.u32 %v51, 2147483648
  %v95 = vsel %vm93, %v94, %v92
  %v96 = vrsqrt.pop %v54
  %v97 = vmul.f32 %v54, %v96
  %vm98 = vcmp.eq.f32.partialorder %v54, inf
  %v99 = vsel %vm98, %v54, %v97
  %vm100 = vcmp.eq.f32.partialorder %v54, 0.0
  %v101 = vand.u32 %v54, 2147483648
  %v102 = vsel %vm100, %v101, %v99
  %v103 = vrsqrt.pop %v57
  %v104 = vmul.f32 %v57, %v103
  %vm105 = vcmp.eq.f32.partialorder %v57, inf
  %v106 = vsel %vm105, %v57, %v104
  %vm107 = vcmp.eq.f32.partialorder %v57, 0.0
  %v108 = vand.u32 %v57, 2147483648
  %v109 = vsel %vm107, %v108, %v106
  %v110 = vrsqrt.pop %v60
  %v111 = vmul.f32 %v60, %v110
  %vm112 = vcmp.eq.f32.partialorder %v60, inf
  %v113 = vsel %vm112, %v60, %v111
  %vm114 = vcmp.eq.f32.partialorder %v60, 0.0
  %v115 = vand.u32 %v60, 2147483648
  %v116 = vsel %vm114, %v115, %v113
  %v117 = vadd.f32 %v67, 1e-08
  %v118 = vadd.f32 %v74, 1e-08
  %v119 = vadd.f32 %v81, 1e-08
  %v120 = vadd.f32 %v88, 1e-08
  %v121 = vadd.f32 %v95, 1e-08
  %v122 = vadd.f32 %v102, 1e-08
  %v123 = vadd.f32 %v109, 1e-08
  %v124 = vadd.f32 %v116, 1e-08
  %v125 = vrcp.pop %v117
  %v126 = vmul.f32 %v20, %v125
  %v127 = vrcp.pop %v118
  %v128 = vmul.f32 %v21, %v127
  %v129 = vrcp.pop %v119
  %v130 = vmul.f32 %v22, %v129
  %v131 = vrcp.pop %v120
  %v132 = vmul.f32 %v23, %v131
  %v133 = vrcp.pop %v121
  %v134 = vmul.f32 %v24, %v133
  %v135 = vrcp.pop %v122
  %v136 = vmul.f32 %v25, %v135
  %v137 = vrcp.pop %v123
  %v138 = vmul.f32 %v26, %v137
  %v139 = vrcp.pop %v124
  %v140 = vmul.f32 %v27, %v139
  %v141 = vld [vmem:[%s1] sm:$0xff]
  %v142 = vld [vmem:[%s1 + $0x8] sm:$0xff]
  %v144 = vsel %vm36, %v126, 0
  %v147 = vsel %vm36, %v128, 0
  %v150 = vsel %vm36, %v130, 0
  %v153 = vsel %vm36, %v132, 0
  %v156 = vsel %vm36, %v134, 0
  %v159 = vsel %vm36, %v136, 0
  %v162 = vsel %vm36, %v138, 0
  %v165 = vsel %vm36, %v140, 0
  %167 = vmatprep.subr.mxu0 0.0
  %168 = vmatpush1.msra.mxu0 %v141
  %169 = vmatprep.subr.mxu0 0.0
  %170 = vmatpush1.msra.mxu0 %v142
  %171 = vmatprep.subr.mxu0 0.0
  %172 = vmatpush1.msra.mxu0 0.0
  %173 = vmatprep.subr.mxu0 0.0
  %174 = vmatpush1.msra.mxu0 0.0
  %175 = vmatprep.subr.mxu0 0.0
  %176 = vmatpush1.msra.mxu0 0.0
  %177 = vmatprep.subr.mxu0 0.0
  %178 = vmatpush1.msra.mxu0 0.0
  %179 = vmatprep.subr.mxu0 0.0
  %180 = vmatpush1.msra.mxu0 0.0
  %181 = vmatprep.subr.mxu0 0.0
  %182 = vmatpush1.msra.mxu0 0.0
  %183 = vmatprep.subr.mxu0 0.0
  %184 = vmatpush1.msra.mxu0 0.0
  %185 = vmatprep.subr.mxu0 0.0
  %186 = vmatpush1.msra.mxu0 0.0
  %187 = vmatprep.subr.mxu0 0.0
  %188 = vmatpush1.msra.mxu0 0.0
  %189 = vmatprep.subr.mxu0 0.0
  %190 = vmatpush1.msra.mxu0 0.0
  %191 = vmatprep.subr.mxu0 0.0
  %192 = vmatpush1.msra.mxu0 0.0
  %193 = vmatprep.subr.mxu0 0.0
  %194 = vmatpush1.msra.mxu0 0.0
  %195 = vmatprep.subr.mxu0 0.0
  %196 = vmatpush1.msra.mxu0 0.0
  %197 = vmatprep.subr.mxu0 0.0
  %198 = vmatpush1.msra.mxu0 0.0
  %199 = vmatprep.subr.mxu0 0.0
  %200 = vmatpush1.msra.mxu0 0.0
  %201 = vmatprep.subr.mxu0 0.0
  %202 = vmatpush1.msra.mxu0 0.0
  %203 = vmatprep.subr.mxu0 0.0
  %204 = vmatpush1.msra.mxu0 0.0
  %205 = vmatprep.subr.mxu0 0.0
  %206 = vmatpush1.msra.mxu0 0.0
  %207 = vmatprep.subr.mxu0 0.0
  %208 = vmatpush1.msra.mxu0 0.0
  %209 = vmatprep.subr.mxu0 0.0
  %210 = vmatpush1.msra.mxu0 0.0
  %211 = vmatprep.subr.mxu0 0.0
  %212 = vmatpush1.msra.mxu0 0.0
  %213 = vmatprep.subr.mxu0 0.0
  %214 = vmatpush1.msra.mxu0 0.0
  %215 = vmatprep.subr.mxu0 0.0
  %216 = vmatpush1.msra.mxu0 0.0
  %217 = vmatprep.subr.mxu0 0.0
  %218 = vmatpush1.msra.mxu0 0.0
  %219 = vmatprep.subr.mxu0 0.0
  %220 = vmatpush1.msra.mxu0 0.0
  %221 = vmatprep.subr.mxu0 0.0
  %222 = vmatpush1.msra.mxu0 0.0
  %223 = vmatprep.subr.mxu0 0.0
  %224 = vmatpush1.msra.mxu0 0.0
  %225 = vmatprep.subr.mxu0 0.0
  %226 = vmatpush1.msra.mxu0 0.0
  %227 = vmatprep.subr.mxu0 0.0
  %228 = vmatpush1.msra.mxu0 0.0
  %229 = vmatprep.subr.mxu0 0.0
  %230 = vmatpush1.msra.mxu0 0.0
  %231 = vmatprep.mubr.f32.mxu0 0.0
  %232 = vmatmul.mubr.f32.gmra.mrb[0].mxu0 %v144
  %v233 = vpop.f32.mrb[0].mxu0
  %v234 = vadd.f32 0.0, %v233
  %v235 = vpop.f32.mrb[0].mxu0
  %236 = vmatprep.mubr.f32.mxu0 0.0
  %237 = vmatmul.mubr.f32.gmra.mrb[0].mxu0 %v147
  %v238 = vpop.f32.mrb[0].mxu0
  %v239 = vadd.f32 0.0, %v238
  %v240 = vpop.f32.mrb[0].mxu0
  %241 = vmatprep.mubr.f32.mxu0 0.0
  %242 = vmatmul.mubr.f32.gmra.mrb[0].mxu0 %v150
  %v243 = vpop.f32.mrb[0].mxu0
  %v244 = vadd.f32 0.0, %v243
  %v245 = vpop.f32.mrb[0].mxu0
  %246 = vmatprep.mubr.f32.mxu0 0.0
  %247 = vmatmul.mubr.f32.gmra.mrb[0].mxu0 %v153
  %v248 = vpop.f32.mrb[0].mxu0
  %v249 = vadd.f32 0.0, %v248
  %v250 = vpop.f32.mrb[0].mxu0
  %251 = vmatprep.mubr.f32.mxu0 0.0
  %252 = vmatmul.mubr.f32.gmra.mrb[0].mxu0 %v156
  %v253 = vpop.f32.mrb[0].mxu0
  %v254 = vadd.f32 0.0, %v253
  %v255 = vpop.f32.mrb[0].mxu0
  %256 = vmatprep.mubr.f32.mxu0 0.0
  %257 = vmatmul.mubr.f32.gmra.mrb[0].mxu0 %v159
  %v258 = vpop.f32.mrb[0].mxu0
  %v259 = vadd.f32 0.0, %v258
  %v260 = vpop.f32.mrb[0].mxu0
  %261 = vmatprep.mubr.f32.mxu0 0.0
  %262 = vmatmul.mubr.f32.gmra.mrb[0].mxu0 %v162
  %v263 = vpop.f32.mrb[0].mxu0
  %v264 = vadd.f32 0.0, %v263
  %v265 = vpop.f32.mrb[0].mxu0
  %266 = vmatprep.mubr.f32.mxu0 0.0
  %267 = vmatmul.mubr.f32.gmra.mrb[0].mxu0 %v165
  %v268 = vpop.f32.mrb[0].mxu0
  %v269 = vadd.f32 0.0, %v268
  %v270 = vpop.f32.mrb[0].mxu0
  %271 = vdwg.mxu0
  %v272 = vmax.f32 %v234, 0.0
  %v273 = vmax.f32 %v239, 0.0
  %v274 = vmax.f32 %v244, 0.0
  %v275 = vmax.f32 %v249, 0.0
  %v276 = vmax.f32 %v254, 0.0
  %v277 = vmax.f32 %v259, 0.0
  %v278 = vmax.f32 %v264, 0.0
  %v279 = vmax.f32 %v269, 0.0
  %v280 = vxor.u32 %v234, 2147483648
  %v281 = vxor.u32 %v239, 2147483648
  %v282 = vxor.u32 %v244, 2147483648
  %v283 = vxor.u32 %v249, 2147483648
  %v284 = vxor.u32 %v254, 2147483648
  %v285 = vxor.u32 %v259, 2147483648
  %v286 = vxor.u32 %v264, 2147483648
  %v287 = vxor.u32 %v269, 2147483648
  %v288 = vmul.f32 %v280, 1.442695
  %v289 = vpow.pop %v288
  %v290 = vmul.f32 %v281, 1.442695
  %v291 = vpow.pop %v290
  %v292 = vmul.f32 %v282, 1.442695
  %v293 = vpow.pop %v292
  %v294 = vmul.f32 %v283, 1.442695
  %v295 = vpow.pop %v294
  %v296 = vmul.f32 %v284, 1.442695
  %v297 = vpow.pop %v296
  %v298 = vmul.f32 %v285, 1.442695
  %v299 = vpow.pop %v298
  %v300 = vmul.f32 %v286, 1.442695
  %v301 = vpow.pop %v300
  %v302 = vmul.f32 %v287, 1.442695
  %v303 = vpow.pop %v302
  %v304 = vadd.f32 %v289, 1.0
  %v305 = vadd.f32 %v291, 1.0
  %v306 = vadd.f32 %v293, 1.0
  %v307 = vadd.f32 %v295, 1.0
  %v308 = vadd.f32 %v297, 1.0
  %v309 = vadd.f32 %v299, 1.0
  %v310 = vadd.f32 %v301, 1.0
  %v311 = vadd.f32 %v303, 1.0
  %v312 = vrcp.pop %v304
  %v313 = vmul.f32 1.0, %v312
  %v314 = vrcp.pop %v305
  %v315 = vmul.f32 1.0, %v314
  %v316 = vrcp.pop %v306
  %v317 = vmul.f32 1.0, %v316
  %v318 = vrcp.pop %v307
  %v319 = vmul.f32 1.0, %v318
  %v320 = vrcp.pop %v308
  %v321 = vmul.f32 1.0, %v320
  %v322 = vrcp.pop %v309
  %v323 = vmul.f32 1.0, %v322
  %v324 = vrcp.pop %v310
  %v325 = vmul.f32 1.0, %v324
  %v326 = vrcp.pop %v311
  %v327 = vmul.f32 1.0, %v326
  %336 = vrot.lane.b32.xlu0 %v313, 96
  %v337 = vpop.permute.xlu0 %336
  %338 = vrot.lane.b32.xlu0 %v315, 96
  %v339 = vpop.permute.xlu0 %338
  %340 = vrot.lane.b32.xlu0 %v317, 96
  %v341 = vpop.permute.xlu0 %340
  %342 = vrot.lane.b32.xlu0 %v319, 96
  %v343 = vpop.permute.xlu0 %342
  %344 = vrot.lane.b32.xlu0 %v321, 96
  %v345 = vpop.permute.xlu0 %344
  %346 = vrot.lane.b32.xlu0 %v323, 96
  %v347 = vpop.permute.xlu0 %346
  %348 = vrot.lane.b32.xlu0 %v325, 96
  %v349 = vpop.permute.xlu0 %348
  %350 = vrot.lane.b32.xlu0 %v327, 96
  %v351 = vpop.permute.xlu0 %350
  %v360 = vmul.f32 %v272, %v337
  %v361 = vmul.f32 %v273, %v339
  %v362 = vmul.f32 %v274, %v341
  %v363 = vmul.f32 %v275, %v343
  %v364 = vmul.f32 %v276, %v345
  %v365 = vmul.f32 %v277, %v347
  %v366 = vmul.f32 %v278, %v349
  %v367 = vmul.f32 %v279, %v351
  %vm368 = vcmask 261120
  %369 = vst.msk [vmem:[%s4] sm:$0xff] %vm368, %v360
  %370 = vst.msk [vmem:[%s4 + $0x8] sm:$0xff] %vm368, %v361
  %371 = vst.msk [vmem:[%s4 + $0x10] sm:$0xff] %vm368, %v362
  %372 = vst.msk [vmem:[%s4 + $0x18] sm:$0xff] %vm368, %v363
  %373 = vst.msk [vmem:[%s4 + $0x20] sm:$0xff] %vm368, %v364
  %374 = vst.msk [vmem:[%s4 + $0x28] sm:$0xff] %vm368, %v365
  %375 = vst.msk [vmem:[%s4 + $0x30] sm:$0xff] %vm368, %v366
  %376 = vst.msk [vmem:[%s4 + $0x38] sm:$0xff] %vm368, %v367
  %vm377 = vcmask 7168
  %378 = vst.msk [vmem:[%s6] sm:$0xff] %vm377, %v67
  %379 = vst.msk [vmem:[%s6 + $0x8] sm:$0xff] %vm377, %v74
  %380 = vst.msk [vmem:[%s6 + $0x10] sm:$0xff] %vm377, %v81
  %381 = vst.msk [vmem:[%s6 + $0x18] sm:$0xff] %vm377, %v88
  %382 = vst.msk [vmem:[%s6 + $0x20] sm:$0xff] %vm377, %v95
  %383 = vst.msk [vmem:[%s6 + $0x28] sm:$0xff] %vm377, %v102
  %384 = vst.msk [vmem:[%s6 + $0x30] sm:$0xff] %vm377, %v109
  %385 = vst.msk [vmem:[%s6 + $0x38] sm:$0xff] %vm377, %v116
  %v386 = vsel %vm368, %v360, 0.0
  %387 = vadd.xlane.f32.xlu0 %v386
  %v388 = vpop.xlane.xlu0 %387
  %v389 = vsel %vm368, %v361, 0.0
  %390 = vadd.xlane.f32.xlu0 %v389
  %v391 = vpop.xlane.xlu0 %390
  %v392 = vsel %vm368, %v362, 0.0
  %393 = vadd.xlane.f32.xlu0 %v392
  %v394 = vpop.xlane.xlu0 %393
  %v395 = vsel %vm368, %v363, 0.0
  %396 = vadd.xlane.f32.xlu0 %v395
  %v397 = vpop.xlane.xlu0 %396
  %v398 = vsel %vm368, %v364, 0.0
  %399 = vadd.xlane.f32.xlu0 %v398
  %v400 = vpop.xlane.xlu0 %399
  %v401 = vsel %vm368, %v365, 0.0
  %402 = vadd.xlane.f32.xlu0 %v401
  %v403 = vpop.xlane.xlu0 %402
  %v404 = vsel %vm368, %v366, 0.0
  %405 = vadd.xlane.f32.xlu0 %v404
  %v406 = vpop.xlane.xlu0 %405
  %v407 = vsel %vm368, %v367, 0.0
  %408 = vadd.xlane.f32.xlu0 %v407
  %v409 = vpop.xlane.xlu0 %408
  %v410 = vrcp.pop 32.0
  %v411 = vmul.f32 %v388, %v410
  %v412 = vmul.f32 %v391, %v410
  %v413 = vmul.f32 %v394, %v410
  %v414 = vmul.f32 %v397, %v410
  %v415 = vmul.f32 %v400, %v410
  %v416 = vmul.f32 %v403, %v410
  %v417 = vmul.f32 %v406, %v410
  %v418 = vmul.f32 %v409, %v410
  %v419 = vsub.f32 %v360, %v411
  %v420 = vsub.f32 %v361, %v412
  %v421 = vsub.f32 %v362, %v413
  %v422 = vsub.f32 %v363, %v414
  %v423 = vsub.f32 %v364, %v415
  %v424 = vsub.f32 %v365, %v416
  %v425 = vsub.f32 %v366, %v417
  %v426 = vsub.f32 %v367, %v418
  %v427 = vmul.f32 %v419, %v419
  %v428 = vmul.f32 %v420, %v420
  %v429 = vmul.f32 %v421, %v421
  %v430 = vmul.f32 %v422, %v422
  %v431 = vmul.f32 %v423, %v423
  %v432 = vmul.f32 %v424, %v424
  %v433 = vmul.f32 %v425, %v425
  %v434 = vmul.f32 %v426, %v426
  %v435 = vsel %vm368, %v427, 0.0
  %436 = vadd.xlane.f32.xlu0 %v435
  %v437 = vpop.xlane.xlu0 %436
  %v438 = vsel %vm368, %v428, 0.0
  %439 = vadd.xlane.f32.xlu0 %v438
  %v440 = vpop.xlane.xlu0 %439
  %v441 = vsel %vm368, %v429, 0.0
  %442 = vadd.xlane.f32.xlu0 %v441
  %v443 = vpop.xlane.xlu0 %442
  %v444 = vsel %vm368, %v430, 0.0
  %445 = vadd.xlane.f32.xlu0 %v444
  %v446 = vpop.xlane.xlu0 %445
  %v447 = vsel %vm368, %v431, 0.0
  %448 = vadd.xlane.f32.xlu0 %v447
  %v449 = vpop.xlane.xlu0 %448
  %v450 = vsel %vm368, %v432, 0.0
  %451 = vadd.xlane.f32.xlu0 %v450
  %v452 = vpop.xlane.xlu0 %451
  %v453 = vsel %vm368, %v433, 0.0
  %454 = vadd.xlane.f32.xlu0 %v453
  %v455 = vpop.xlane.xlu0 %454
  %v456 = vsel %vm368, %v434, 0.0
  %457 = vadd.xlane.f32.xlu0 %v456
  %v458 = vpop.xlane.xlu0 %457
  %v459 = vmul.f32 %v437, %v410
  %v460 = vmul.f32 %v440, %v410
  %v461 = vmul.f32 %v443, %v410
  %v462 = vmul.f32 %v446, %v410
  %v463 = vmul.f32 %v449, %v410
  %v464 = vmul.f32 %v452, %v410
  %v465 = vmul.f32 %v455, %v410
  %v466 = vmul.f32 %v458, %v410
  %v467 = vadd.f32 %v459, 1e-05
  %v468 = vadd.f32 %v460, 1e-05
  %v469 = vadd.f32 %v461, 1e-05
  %v470 = vadd.f32 %v462, 1e-05
  %v471 = vadd.f32 %v463, 1e-05
  %v472 = vadd.f32 %v464, 1e-05
  %v473 = vadd.f32 %v465, 1e-05
  %v474 = vadd.f32 %v466, 1e-05
  %v475 = vrsqrt.pop %v467
  %v476 = vrsqrt.pop %v468
  %v477 = vrsqrt.pop %v469
  %v478 = vrsqrt.pop %v470
  %v479 = vrsqrt.pop %v471
  %v480 = vrsqrt.pop %v472
  %v481 = vrsqrt.pop %v473
  %v482 = vrsqrt.pop %v474
  %v483 = vmul.f32 %v419, %v475
  %v484 = vmul.f32 %v420, %v476
  %v485 = vmul.f32 %v421, %v477
  %v486 = vmul.f32 %v422, %v478
  %v487 = vmul.f32 %v423, %v479
  %v488 = vmul.f32 %v424, %v480
  %v489 = vmul.f32 %v425, %v481
  %v490 = vmul.f32 %v426, %v482
  %v491 = vld [vmem:[%s2] sm:$0x1]
  %v493 = vlaneseq
  %v494 = vshrl.u32 %v493, 7
  %v495 = vsub.s32 0, %v494
  %v496 = vrot.slane %v491, %v495
  %v498 = vmul.f32 %v483, %v496
  %v499 = vmul.f32 %v484, %v496
  %v500 = vmul.f32 %v485, %v496
  %v501 = vmul.f32 %v486, %v496
  %v502 = vmul.f32 %v487, %v496
  %v503 = vmul.f32 %v488, %v496
  %v504 = vmul.f32 %v489, %v496
  %v505 = vmul.f32 %v490, %v496
  %v506 = vld [vmem:[%s3] sm:$0x1]
  %v508 = vlaneseq
  %v509 = vshrl.u32 %v508, 7
  %v510 = vsub.s32 0, %v509
  %v511 = vrot.slane %v506, %v510
  %v513 = vadd.f32 %v498, %v511
  %v514 = vadd.f32 %v499, %v511
  %v515 = vadd.f32 %v500, %v511
  %v516 = vadd.f32 %v501, %v511
  %v517 = vadd.f32 %v502, %v511
  %v518 = vadd.f32 %v503, %v511
  %v519 = vadd.f32 %v504, %v511
  %v520 = vadd.f32 %v505, %v511
  %521 = vst.msk [vmem:[%s5] sm:$0xff] %vm368, %v513
  %522 = vst.msk [vmem:[%s5 + $0x8] sm:$0xff] %vm368, %v514
  %523 = vst.msk [vmem:[%s5 + $0x10] sm:$0xff] %vm368, %v515
  %524 = vst.msk [vmem:[%s5 + $0x18] sm:$0xff] %vm368, %v516
  %525 = vst.msk [vmem:[%s5 + $0x20] sm:$0xff] %vm368, %v517
  %526 = vst.msk [vmem:[%s5 + $0x28] sm:$0xff] %vm368, %v518
  %527 = vst.msk [vmem:[%s5 + $0x30] sm:$0xff] %vm368, %v519
  %528 = vst.msk [vmem:[%s5 + $0x38] sm:$0xff] %vm368, %v520
  // Predicated region
  $region18: #{tpu_custom_call.1} parent=0 // pred_check
    _
  $region19: #{tpu_custom_call.1} parent=0 // pred_check_branch
    %530 = sbr.rel (0) target = $region21
  $region20: #{tpu_custom_call.1} parent=0 // pred_region
    _
  $region21: #{tpu_custom_call.1} parent=0 // pred_fallthru
    _
  // Predicated region
  $region22: #{tpu_custom_call.1} parent=0 // pred_check
    _
  $region23: #{tpu_custom_call.1} parent=0 // pred_check_branch
    %532 = sbr.rel (0) target = $region25
  $region24: #{tpu_custom_call.1} parent=0 // pred_region
    _
  $region25: #{tpu_custom_call.1} parent=0 // pred_fallthru
    _
  // Predicated region
  $region26: #{tpu_custom_call.1} parent=0 // pred_check
    _
  $region27: #{tpu_custom_call.1} parent=0 // pred_check_branch
    %534 = sbr.rel (0) target = $region29
  $region28: #{tpu_custom_call.1} parent=0 // pred_region
    _
  $region29: #{tpu_custom_call.1} parent=0 // pred_fallthru
    _
  // Predicated region
  $region30: #{tpu_custom_call.1} parent=0 // pred_check
    _
  $region31: #{tpu_custom_call.1} parent=0 // pred_check_branch
    %536 = sbr.rel (0) target = $region33
  $region32: #{tpu_custom_call.1} parent=0 // pred_region
    _
  $region33: #{tpu_custom_call.1} parent=0 // pred_fallthru
    _
  // Predicated region
  $region34: #{tpu_custom_call.1} parent=0 // pred_check
    _
  $region35: #{tpu_custom_call.1} parent=0 // pred_check_branch
    %538 = sbr.rel (0) target = $region37
  $region36: #{tpu_custom_call.1} parent=0 // pred_region
    _
  $region37: #{tpu_custom_call.1} parent=0 // pred_fallthru
    _
  // Predicated region
  $region38: #{tpu_custom_call.1} parent=0 // pred_check
    _
  $region39: #{tpu_custom_call.1} parent=0 // pred_check_branch
    %540 = sbr.rel (0) target = $region41
  $region40: #{tpu_custom_call.1} parent=0 // pred_region
    _
  $region41: #{tpu_custom_call.1} parent=0 // pred_fallthru
    _

</llo_original>
